<compile_context>
chip_gen: v7x
topology: tpu7x:2x2x1
jax: 0.10.0
libtpu: 0.0.40
codegen_flags: <defaults>
</compile_context>

<pallas_src>
import functools
import math

import jax
import jax.numpy as jnp
from jax.experimental import pallas as pl
from jax.experimental.pallas import tpu as pltpu


def _tile_lanes(x, n):
    """Repeat `x` n times along the last (lane) axis via log-depth concatenation.

    jnp.concatenate on the minor dim lowers cleanly in Mosaic (same pattern as
    RoPE half-concats); avoids the broadcast+reshape that jnp.tile would emit.
    """
    if n == 1:
        return x
    out = x
    built = 1
    while built * 2 <= n:
        out = jnp.concatenate([out, out], axis=-1)
        built *= 2
    if built < n:
        out = jnp.concatenate([out, _tile_lanes(x, n - built)], axis=-1)
    return out


def _add_tpe_kernel(t_ref, tok_ref, o_ref, *, n_rep):
    """One grid step.

    t block:      (tm, D)
    tokens block: (tm, n_rep * D)   -- lane-dense (N folded into lanes)
    out block:    (tm, n_rep * D)

    out[m, n*D + d] = tokens[m, n*D + d] + t[m, d]
    """
    t = _tile_lanes(t_ref[...], n_rep)  # (tm, n_rep * D)
    o_ref[...] = tok_ref[...].astype(o_ref.dtype) + t.astype(o_ref.dtype)


def _choose_tiles(m, n, d, itemsize, target_bytes):
    """Pick (tm rows, nl tokens-per-lane-block).

    * tokens/out block = (tm, nl*D); aim for ~target_bytes per block.
    * tm is a multiple of 8 (or the full extent when m < 8).
    * nl*D is kept a multiple of 128 whenever nl < n (BlockSpec legality +
      unmasked full-width stores); nl == n (full extent) is always legal.
    * Guarantee >= 2 total grid steps when there is enough work so the
      ("parallel", "parallel") grid can be sharded across both v7x TCs.
    """
    # Tokens folded into the lane axis per block.
    nl = n
    if 8 * n * d * itemsize > target_bytes:
        nl = max(1, int(target_bytes // (8 * d * itemsize)))
        step = 128 // math.gcd(d, 128)
        if nl >= step:
            nl = (nl // step) * step
        else:
            # Degenerate (huge, non-128-multiple D): full lane extent is the
            # only always-legal choice.
            nl = n
    nl = max(1, min(nl, n))

    # Rows (flattened B*T) per block.
    row_bytes = nl * d * itemsize
    if m <= 8:
        tm = m
    else:
        tm = int(target_bytes // max(row_bytes, 1))
        tm = max(8, (tm // 8) * 8)
        tm = min(tm, max(8, (m // 8) * 8))
        if pl.cdiv(m, tm) * pl.cdiv(n, nl) < 2:
            # Split M so both TensorCores get work (flat 2x on v7x otherwise).
            tm = max(8, ((pl.cdiv(m, 2) + 7) // 8) * 8)
    return tm, nl


def additive_temporal_positional_encoding(t, tokens, *, target_block_bytes=6 << 20):
    """JAX/Pallas equivalent of AdditiveTemporalPositionalEncoding.forward with
    the default transform:

        out[b, s, n, d] = t[b, s, d] + tokens[b, s, n, d]

    t:      [B, T, D]
    tokens: [B, T, N, D]
    """
    B, T, N, D = tokens.shape
    assert t.shape == (B, T, D), (t.shape, tokens.shape)

    out_dtype = jnp.result_type(t.dtype, tokens.dtype)
    M, L = B * T, N * D

    # Free, contiguous views; NO wrapper-side dtype casts (those would stream
    # the whole token tensor through HBM an extra time).
    t2 = t.reshape(M, D)
    tok2 = tokens.reshape(M, L)  # lane-dense: trailing dim is N*D

    itemsize = max(jnp.dtype(tokens.dtype).itemsize, jnp.dtype(out_dtype).itemsize)
    tm, nl = _choose_tiles(M, N, D, itemsize, target_block_bytes)
    tl = nl * D
    grid = (pl.cdiv(M, tm), pl.cdiv(N, nl))

    # VMEM budget: double buffers for tokens-in, out, and the small t block.
    tok_block = tm * tl * jnp.dtype(tokens.dtype).itemsize
    out_block = tm * tl * jnp.dtype(out_dtype).itemsize
    t_block = tm * D * jnp.dtype(t.dtype).itemsize
    vmem_needed = 2 * (tok_block + out_block + t_block) + (2 << 20)
    vmem_limit = int(min(max(vmem_needed, 32 << 20), 48 << 20))

    bytes_accessed = (
        M * L * (jnp.dtype(tokens.dtype).itemsize + jnp.dtype(out_dtype).itemsize)
        + grid[1] * M * D * jnp.dtype(t.dtype).itemsize
    )

    out = pl.pallas_call(
        functools.partial(_add_tpe_kernel, n_rep=nl),
        out_shape=jax.ShapeDtypeStruct((M, L), out_dtype),
        grid_spec=pl.GridSpec(
            grid=grid,
            in_specs=[
                pl.BlockSpec((tm, D), lambda i, j: (i, 0)),   # t (tiny; re-read per j)
                pl.BlockSpec((tm, tl), lambda i, j: (i, j)),  # tokens
            ],
            out_specs=pl.BlockSpec((tm, tl), lambda i, j: (i, j)),
        ),
        compiler_params=pltpu.CompilerParams(
            dimension_semantics=("parallel", "parallel"),
            vmem_limit_bytes=vmem_limit,
        ),
        cost_estimate=pl.CostEstimate(
            flops=M * L,
            transcendentals=0,
            bytes_accessed=int(bytes_accessed),
        ),
    )(t2, tok2)

    return out.reshape(B, T, N, D)


if __name__ == "__main__":
    key = jax.random.PRNGKey(0)
    B, T, N, D = 2, 8, 4, 32  # batch, time, tokens-per-step, hidden

    k1, k2 = jax.random.split(key)
    t = jax.random.normal(k1, (B, T, D), dtype=jnp.float32)
    tokens = jax.random.normal(k2, (B, T, N, D), dtype=jnp.float32)

    y = additive_temporal_positional_encoding(t, tokens)
    y = jax.block_until_ready(y)

    # Reference: default transform is unsqueeze(2) then broadcast add.
    ref = t[:, :, None, :] + tokens
    assert y.shape == ref.shape
    assert bool(jnp.allclose(y, ref, atol=1e-6, rtol=1e-6)), "mismatch vs reference"

    print("KERNEL_OK")
</pallas_src>

<mosaic_0001>
module attributes {stable_mosaic.version = 11 : i64} {
  func.func @_add_tpe_kernel(%arg0: i32, %arg1: i32, %arg2: memref<8x32xf32, #tpu.memory_space<vmem>>, %arg3: memref<8x128xf32, #tpu.memory_space<vmem>>, %arg4: memref<8x128xf32, #tpu.memory_space<vmem>>) attributes {dimension_semantics = [#tpu.dimension_semantics<parallel>, #tpu.dimension_semantics<parallel>], iteration_bounds = array<i64: 2, 1>, scalar_prefetch = 0 : i64, scratch_operands = 0 : i64, tpu.core_type = #tpu.core_type<tc>, window_params = [{transform_indices = @transform_0, window_bounds = array<i64: 8, 32>}, {transform_indices = @transform_1, window_bounds = array<i64: 8, 128>}, {transform_indices = @transform_2, window_bounds = array<i64: 8, 128>}]} {
    %c0 = arith.constant 0 : index
    %c0_0 = arith.constant 0 : index
    %0 = vector.load %arg2[%c0, %c0_0] : memref<8x32xf32, #tpu.memory_space<vmem>>, vector<8x32xf32>
    %1 = tpu.concatenate %0, %0 in 1 : vector<8x32xf32>, vector<8x32xf32> -> vector<8x64xf32>
    %2 = tpu.concatenate %1, %1 in 1 : vector<8x64xf32>, vector<8x64xf32> -> vector<8x128xf32>
    %c0_1 = arith.constant 0 : index
    %c0_2 = arith.constant 0 : index
    %3 = vector.load %arg3[%c0_1, %c0_2] : memref<8x128xf32, #tpu.memory_space<vmem>>, vector<8x128xf32>
    %4 = arith.addf %3, %2 : vector<8x128xf32>
    %c0_3 = arith.constant 0 : index
    %c0_4 = arith.constant 0 : index
    %5 = vector.load %arg4[%c0_3, %c0_4] : memref<8x128xf32, #tpu.memory_space<vmem>>, vector<8x128xf32>
    tpu.vector_store %arg4[%c0_3, %c0_4], %4 {strides = array<i32>} : memref<8x128xf32, #tpu.memory_space<vmem>>, vector<8x128xf32>,
    return
  }
  func.func @transform_0(%arg0: i32, %arg1: i32) -> (i32, i32) {
    %c0_i32 = arith.constant 0 : i32
    %c0_i32_0 = arith.constant 0 : i32
    return %arg0, %c0_i32 : i32, i32
  }
  func.func @transform_1(%arg0: i32, %arg1: i32) -> (i32, i32) {
    %c0_i32 = arith.constant 0 : i32
    return %arg0, %arg1 : i32, i32
  }
  func.func @transform_2(%arg0: i32, %arg1: i32) -> (i32, i32) {
    %c0_i32 = arith.constant 0 : i32
    return %arg0, %arg1 : i32, i32
  }
}

</mosaic_0001>

<llo_original>
// kernel: tpu_custom_call.1
$region0: #{tpu_custom_call.1}
  #allocation0 [shape = 'u32[]', space=smem, size = 0x4, offset = 0x4, fixed_abs, tag = 'smem constant byte address 0x4 - core index']
  #allocation1 [shape = 'u32[144,128]{1,0:T(1,128)}', space=vmem, size = 0x12000, scoped, tag = 'internal scratch']
  %s0 = inlined_call_operand.hbm [shape: f32[16,32], index: 0, kind: input, shape index: {}]
  %s1 = inlined_call_operand.hbm [shape: f32[16,128], index: 1, kind: input, shape index: {}]
  %s2 = inlined_call_operand.hbm [shape: f32[16,128], index: 2, kind: output, shape index: {}]
  %s3 = sld [smem:[#allocation0]]
  $region49: #{tpu_custom_call.1} parent=0
    _
  %s5 = ssub.s32 1, %s3
  %s6 = scalar_select 0, %s5, %s3
  $region1: #{tpu_custom_call.1} parent=0
    #allocation2 [shape = 'u8[8192]{0}', space=vmem, size = 0x2000, scoped, tag = 'input window, operand 0']
    #allocation3 [shape = 's32[2]{0}', space=sflag, size = 0x8, scoped, tag = 'scoped memory for tpu_custom_call.1']
    #allocation4 [shape = 's32[2]{0}', space=sflag, size = 0x8, scoped, tag = 'scoped memory for tpu_custom_call.1']
    #allocation5 [shape = 'u8[8192]{0}', space=vmem, size = 0x2000, scoped, tag = 'input window, operand 1']
    #allocation6 [shape = 's32[2]{0}', space=sflag, size = 0x8, scoped, tag = 'scoped memory for tpu_custom_call.1']
    #allocation7 [shape = 'u8[8192]{0}', space=vmem, size = 0x2000, scoped, tag = 'output window, operand 0']
    %7 = vsyncpa [#allocation3], 0
    %s8 = scalar_lea.sflag [#allocation3], 1
    %9 = vsyncpa %s8, 0
    %10 = vsyncpa [#allocation6], 0
    %s11 = scalar_lea.sflag [#allocation6], 1
    %12 = vsyncpa %s11, 0
    %13 = vsyncpa [#allocation4], 0
    %s14 = scalar_lea.sflag [#allocation4], 1
    %15 = vsyncpa %s14, 0
    loop: start=0, step=1, limit=4
    $region2: #{tpu_custom_call.1} parent=1 // loop_pre_header
      _
    $region3: #{tpu_custom_call.1} parent=1 // loop_header
      %s17 = sphi 0, %s21
      %p18 = scmp.ge.s32.totalorder %s17, 4
      %s24 = sphi 0, %s36
      %s25 = sphi 0, %s32
      %s26 = sphi 0, %s24
      %s27 = sphi 0, %s25
      %s28 = sphi 0, %s26
      %s29 = sphi 0, %s27
      %s39 = sphi 0, %s41
      %s42 = sphi 0, %s39
      %s43 = sphi 0, %s42
      %s59 = sphi 0, %s43
      %s67 = sphi 0, %s69
      %s70 = sphi 0, %s67
      %s71 = sphi 0, %s70
      %s87 = sphi 0, %s71
      %s95 = sphi 0, %s97
      %s98 = sphi 0, %s95
      %s99 = sphi 0, %s98
      %s115 = sphi 0, %s99
    $region4: #{tpu_custom_call.1} parent=1 // loop_header_branch
      %20 = sbr.rel (%p18) target = $region8
    $region5: #{tpu_custom_call.1} parent=1 // loop_body
      %s22 = ssub.s32 %s17, 1
      %s23 = ssub.s32 %s17, 2
      %s30 = sadd.s32 1, %s25
      %p31 = scmp.ge.s32.totalorder %s30, 1
      %s32 = scalar_select %p31, 0, %s30
      %s33 = sadd.s32 1, %s24
      %s34 = scalar_select %p31, %s33, %s24
      %p35 = scmp.ge.s32.totalorder %s34, 2
      %s36 = scalar_select %p35, 0, %s34
      %s37 = ssub.s32 %s24, %s36
      %p38 = scmp.eq.s32.totalorder %s37, 0
      %s40 = sadd.s32 %s39, 1
      %s41 = scalar_select %p38, %s39, %s40
      %p44 = pneg %p38
      %p45 = scmp.eq.s32.totalorder %s17, 1
      %p46 = por %p44, %p45
      %p47 = scmp.ne.s32.totalorder %s39, %s42
      %p48 = scmp.eq.s32.totalorder %s17, 0
      %p49 = por %p47, %p48
      %p50 = scmp.ne.s32.totalorder %s39, %s42
      %p51 = scmp.eq.s32.totalorder %s22, 1
      %p52 = por %p50, %p51
      %p53 = scmp.ne.s32.totalorder %s42, %s43
      %p54 = scmp.eq.s32.totalorder %s22, 0
      %p55 = por %p53, %p54
      %p56 = scmp.ne.s32.totalorder %s42, %s43
      %p57 = scmp.eq.s32.totalorder %s23, 1
      %p58 = por %p56, %p57
      %p60 = scmp.ne.s32.totalorder %s43, %s59
      %p61 = scmp.eq.s32.totalorder %s23, 0
      %p62 = por %p60, %p61
      %s63 = ssub.s32 %s24, %s36
      %s64 = ssub.s32 %s25, %s32
      %s65 = sor.u32 %s63, %s64
      %p66 = scmp.eq.s32.totalorder %s65, 0
      %s68 = sadd.s32 %s67, 1
      %s69 = scalar_select %p66, %s67, %s68
      %p72 = pneg %p66
      %p73 = scmp.eq.s32.totalorder %s17, 1
      %p74 = por %p72, %p73
      %p75 = scmp.ne.s32.totalorder %s67, %s70
      %p76 = scmp.eq.s32.totalorder %s17, 0
      %p77 = por %p75, %p76
      %p78 = scmp.ne.s32.totalorder %s67, %s70
      %p79 = scmp.eq.s32.totalorder %s22, 1
      %p80 = por %p78, %p79
      %p81 = scmp.ne.s32.totalorder %s70, %s71
      %p82 = scmp.eq.s32.totalorder %s22, 0
      %p83 = por %p81, %p82
      %p84 = scmp.ne.s32.totalorder %s70, %s71
      %p85 = scmp.eq.s32.totalorder %s23, 1
      %p86 = por %p84, %p85
      %p88 = scmp.ne.s32.totalorder %s71, %s87
      %p89 = scmp.eq.s32.totalorder %s23, 0
      %p90 = por %p88, %p89
      %s91 = ssub.s32 %s24, %s36
      %s92 = ssub.s32 %s25, %s32
      %s93 = sor.u32 %s91, %s92
      %p94 = scmp.eq.s32.totalorder %s93, 0
      %s96 = sadd.s32 %s95, 1
      %s97 = scalar_select %p94, %s95, %s96
      %p100 = pneg %p94
      %p101 = scmp.eq.s32.totalorder %s17, 1
      %p102 = por %p100, %p101
      %p103 = scmp.ne.s32.totalorder %s95, %s98
      %p104 = scmp.eq.s32.totalorder %s17, 0
      %p105 = por %p103, %p104
      %p106 = scmp.ne.s32.totalorder %s95, %s98
      %p107 = scmp.eq.s32.totalorder %s22, 1
      %p108 = por %p106, %p107
      %p109 = scmp.ne.s32.totalorder %s98, %s99
      %p110 = scmp.eq.s32.totalorder %s22, 0
      %p111 = por %p109, %p110
      %p112 = scmp.ne.s32.totalorder %s98, %s99
      %p113 = scmp.eq.s32.totalorder %s23, 1
      %p114 = por %p112, %p113
      %p116 = scmp.ne.s32.totalorder %s99, %s115
      %p117 = scmp.eq.s32.totalorder %s23, 0
      %p118 = por %p116, %p117
      %p119 = scmp.le.s32.totalorder 1, %s17
      %p120 = scmp.lt.s32.totalorder %s17, 3
      %p121 = pnand %p119, %p120
      %p122 = pneg %p121
      // Predicated region
      $region9: #{tpu_custom_call.1} parent=5 // pred_check
        _
      $region10: #{tpu_custom_call.1} parent=5 // pred_check_branch
        %124 = sbr.rel (%p121) target = $region12
      $region11: #{tpu_custom_call.1} parent=5 // pred_region
        %s125 = ssub.s32 %s17, 1
      $region12: #{tpu_custom_call.1} parent=5 // pred_fallthru
        _
      %p126 = scmp.lt.s32.totalorder %s17, 2
      // Predicated region
      $region13: #{tpu_custom_call.1} parent=5 // pred_check
        %p127 = pneg %p126
      $region14: #{tpu_custom_call.1} parent=5 // pred_check_branch
        %129 = sbr.rel (%p127) target = $region16
      $region15: #{tpu_custom_call.1} parent=5 // pred_region
        // Predicated region
        $region17: #{tpu_custom_call.1} parent=15 // pred_check
          %p130 = pneg %p49
        $region18: #{tpu_custom_call.1} parent=15 // pred_check_branch
          %132 = sbr.rel (%p130) target = $region20
        $region19: #{tpu_custom_call.1} parent=15 // pred_region
          %s133 = sand.u32 %s39, 1
          %s134 = scalar_lea.sflag [#allocation3], %s133
          %s135 = sand.u32 %s39, 1
          %s136 = smul.addr %s135, 8
          %s137 = scalar_lea.vmem [#allocation2], %s136
          %s139 = ssub.s32 128, 128
          %140 = vsyncadd %s134, %s139
          %s141 = smul.addr %s24, 128
          %s142 = scalar_lea.hbm %s0, %s141
          %s144 = sshll.u32 %s137, 4
          %s145 = int_to_ptr.vmem [resolvable:$true] %s144
          %147 = dma.hbm_to_vmem [thread:$0]  %s142, 128, %s145, %s134
        $region20: #{tpu_custom_call.1} parent=15 // pred_fallthru
          _
        // Predicated region
        $region21: #{tpu_custom_call.1} parent=15 // pred_check
          %p148 = pneg %p77
        $region22: #{tpu_custom_call.1} parent=15 // pred_check_branch
          %150 = sbr.rel (%p148) target = $region24
        $region23: #{tpu_custom_call.1} parent=15 // pred_region
          %s151 = sand.u32 %s67, 1
          %s152 = scalar_lea.sflag [#allocation6], %s151
          %s153 = sand.u32 %s67, 1
          %s154 = smul.addr %s153, 8
          %s155 = scalar_lea.vmem [#allocation5], %s154
          %s157 = ssub.s32 128, 128
          %158 = vsyncadd %s152, %s157
          %s159 = sadd.s32 %s25, %s24
          %s160 = smul.addr %s159, 128
          %s161 = scalar_lea.hbm %s1, %s160
          %s163 = sshll.u32 %s155, 4
          %s164 = int_to_ptr.vmem [resolvable:$true] %s163
          %166 = dma.hbm_to_vmem [thread:$0]  %s161, 128, %s164, %s152
        $region24: #{tpu_custom_call.1} parent=15 // pred_fallthru
          _
      $region16: #{tpu_custom_call.1} parent=5 // pred_fallthru
        _
      %p167 = scmp.le.s32.totalorder 1, %s17
      %p168 = scmp.lt.s32.totalorder %s17, 3
      %p169 = pnand %p167, %p168
      %p170 = pneg %p169
      // Predicated region
      $region25: #{tpu_custom_call.1} parent=5 // pred_check
        _
      $region26: #{tpu_custom_call.1} parent=5 // pred_check_branch
        %172 = sbr.rel (%p169) target = $region28
      $region27: #{tpu_custom_call.1} parent=5 // pred_region
        %s173 = ssub.s32 %s17, 1
        %s174 = sand.u32 %s42, 1
        %s175 = scalar_lea.sflag [#allocation3], %s174
        %s176 = sand.u32 %s42, 1
        %s177 = smul.addr %s176, 8
        %s178 = scalar_lea.vmem [#allocation2], %s177
        // Predicated region
        $region29: #{tpu_custom_call.1} parent=27 // pred_check
          %p179 = pneg %p55
        $region30: #{tpu_custom_call.1} parent=27 // pred_check_branch
          %181 = sbr.rel (%p179) target = $region32
        $region31: #{tpu_custom_call.1} parent=27 // pred_region
          %182 = dma.done %s175, 128
        $region32: #{tpu_custom_call.1} parent=27 // pred_fallthru
          _
        %s183 = sand.u32 %s70, 1
        %s184 = scalar_lea.sflag [#allocation6], %s183
        %s185 = sand.u32 %s70, 1
        %s186 = smul.addr %s185, 8
        %s187 = scalar_lea.vmem [#allocation5], %s186
        // Predicated region
        $region33: #{tpu_custom_call.1} parent=27 // pred_check
          %p188 = pneg %p83
        $region34: #{tpu_custom_call.1} parent=27 // pred_check_branch
          %190 = sbr.rel (%p188) target = $region36
        $region35: #{tpu_custom_call.1} parent=27 // pred_region
          %191 = dma.done %s184, 128
        $region36: #{tpu_custom_call.1} parent=27 // pred_fallthru
          _
        %s192 = sand.u32 %s42, 1
        %s193 = scalar_lea.sflag [#allocation3], %s192
        %s194 = sand.u32 %s42, 1
        %s195 = smul.addr %s194, 8
        %s196 = scalar_lea.vmem [#allocation2], %s195
        %p197 = pneg %p55
        %p198 = pneg %p52
        %s199 = sand.u32 %s70, 1
        %s200 = scalar_lea.sflag [#allocation6], %s199
        %s201 = sand.u32 %s70, 1
        %s202 = smul.addr %s201, 8
        %s203 = scalar_lea.vmem [#allocation5], %s202
        %p204 = pneg %p83
        %p205 = pneg %p80
        %p206 = pneg %p111
        %p207 = pneg %p108
        %s208 = sand.u32 %s98, 1
        %s209 = scalar_lea.sflag [#allocation4], %s208
        %s210 = sand.u32 %s98, 1
        %s211 = smul.addr %s210, 8
        %s212 = scalar_lea.vmem [#allocation7], %s211
        %v213 = vld [vmem:[%s178] sm:$0xff]
        %215 = vrot.lane.b32.xlu0 %v213, 32
        %v216 = vpop.permute.xlu0 %215
        %vm218 = vcmask 261120
        %v219 = vsel %vm218, %v213, %v216
        %221 = vrot.lane.b32.xlu0 %v219, 64
        %v222 = vpop.permute.xlu0 %221
        %vm224 = vcmask 523264
        %v225 = vsel %vm224, %v219, %v222
        %v226 = vld [vmem:[%s187] sm:$0xff]
        %v227 = vadd.f32 %v226, %v225
        %228 = vst [vmem:[%s212] sm:$0xff] %v227
        %s229 = sand.u32 %s98, 1
        %s230 = scalar_lea.sflag [#allocation4], %s229
        %s231 = sand.u32 %s98, 1
        %s232 = smul.addr %s231, 8
        %s233 = scalar_lea.vmem [#allocation7], %s232
        // Predicated region
        $region37: #{tpu_custom_call.1} parent=27 // pred_check
          %p234 = pneg %p108
        $region38: #{tpu_custom_call.1} parent=27 // pred_check_branch
          %236 = sbr.rel (%p234) target = $region40
        $region39: #{tpu_custom_call.1} parent=27 // pred_region
          %s238 = ssub.s32 128, 128
          %239 = vsyncadd %s230, %s238
          %s240 = sadd.s32 %s27, %s26
          %s241 = smul.addr %s240, 128
          %s242 = scalar_lea.hbm %s2, %s241
          %s244 = sshll.u32 %s233, 4
          %s245 = int_to_ptr.vmem [resolvable:$true] %s244
          %247 = dma.vmem_to_hbm [thread:$0]  %s245, 128, %s242, %s230
        $region40: #{tpu_custom_call.1} parent=27 // pred_fallthru
          _
      $region28: #{tpu_custom_call.1} parent=5 // pred_fallthru
        _
      %p248 = scmp.le.s32.totalorder 2, %s17
      // Predicated region
      $region41: #{tpu_custom_call.1} parent=5 // pred_check
        %p249 = pneg %p248
      $region42: #{tpu_custom_call.1} parent=5 // pred_check_branch
        %251 = sbr.rel (%p249) target = $region44
      $region43: #{tpu_custom_call.1} parent=5 // pred_region
        %s252 = ssub.s32 %s17, 2
        // Predicated region
        $region45: #{tpu_custom_call.1} parent=43 // pred_check
          %p253 = pneg %p114
        $region46: #{tpu_custom_call.1} parent=43 // pred_check_branch
          %255 = sbr.rel (%p253) target = $region48
        $region47: #{tpu_custom_call.1} parent=43 // pred_region
          %s256 = sand.u32 %s99, 1
          %s257 = scalar_lea.sflag [#allocation4], %s256
          %s258 = sand.u32 %s99, 1
          %s259 = smul.addr %s258, 8
          %s260 = scalar_lea.vmem [#allocation7], %s259
          %261 = dma.done %s257, 128
        $region48: #{tpu_custom_call.1} parent=43 // pred_fallthru
          _
      $region44: #{tpu_custom_call.1} parent=5 // pred_fallthru
        _
    $region6: #{tpu_custom_call.1} parent=1 // loop_footer
      %s21 = sadd.s32 1, %s17
    $region7: #{tpu_custom_call.1} parent=1 // loop_footer_branch
      %16 = sbr.rel target = $region3
    $region8: #{tpu_custom_call.1} parent=1 // loop_exit
      _
    %262 = vsyncpa [#allocation3], 1
    %s263 = scalar_lea.sflag [#allocation3], 1
    %264 = vsyncpa %s263, 1
    %265 = vsyncpa [#allocation6], 1
    %s266 = scalar_lea.sflag [#allocation6], 1
    %267 = vsyncpa %s266, 1
    %268 = vsyncpa [#allocation4], 1
    %s269 = scalar_lea.sflag [#allocation4], 1
    %270 = vsyncpa %s269, 1

</llo_original>
